<compile_context>
chip_gen: v5e
topology: v5e:2x2
jax: 0.10.0
libtpu: 0.0.40
codegen_flags: <defaults>
</compile_context>

<pallas_src>
import jax
import jax.numpy as jnp
from jax.experimental import pallas as pl
from jax.experimental.pallas import tpu as pltpu


def _round_up(n, m):
    return -(-n // m) * m


def _cdiv(a, b):
    return -(-a // b)


def _make_mse_partial_kernel(B, D, tb, td, mask_rows, mask_cols):
    """Kernel computing an (8, td) partial sum of squared diffs per (tb, td) tile."""

    def kernel(x_ref, c_ref, o_ref):
        # x_ref: (tb, td), c_ref: (1, td) f32, o_ref: (1, 1, 8, td) f32
        x = x_ref[...].astype(jnp.float32)
        c = c_ref[...]                      # already f32; broadcast over rows
        diff = x - c                        # VPU elementwise
        sq = diff * diff

        if mask_rows or mask_cols:
            valid = None
            if mask_rows:
                i = pl.program_id(0)
                row = jax.lax.broadcasted_iota(jnp.int32, (tb, td), 0) + i * tb
                valid = row < B
            if mask_cols:
                j = pl.program_id(1)
                col = jax.lax.broadcasted_iota(jnp.int32, (tb, td), 1) + j * td
                cmask = col < D
                valid = cmask if valid is None else (valid & cmask)
            # where() after the square: OOB garbage (even inf/nan) is dropped.
            sq = jnp.where(valid, sq, 0.0)

        # Reduce row-groups of 8 on the VPU (layout-friendly reshape of the
        # sublane axis); keeps XLU traffic at zero and the store lane-dense.
        part = jnp.sum(sq.reshape(tb // 8, 8, td), axis=0)    # (8, td)
        o_ref[...] = part[None, None]

    return kernel


def latent_center_regularizer(x, latent_center, *, force_pallas=False,
                              max_block_bytes=None):
    """MSE(x, broadcast(latent_center)) computed with a Pallas TPU kernel.

    x:              [B, D] float array
    latent_center:  [D] (or [1, D]) float array, broadcast over the batch
    returns: scalar float32
    """
    B, D = x.shape
    c = jnp.asarray(latent_center, dtype=jnp.float32).reshape(1, D)
    itemsize = jnp.dtype(x.dtype).itemsize

    # Tiny inputs: pallas_call launch + DMA setup (~us) dominates; let XLA fuse.
    if not force_pallas and B * D * itemsize < 256 * 1024:
        return jnp.mean((x.astype(jnp.float32) - c) ** 2)

    try:
        vmem_cap = int(pltpu.get_tpu_info().vmem_capacity_bytes)
    except Exception:
        vmem_cap = 64 * 1024 * 1024  # conservative (v7x per-TC)

    if max_block_bytes is None:
        # ~8 MiB x tiles on 128 MiB-VMEM parts (v5e/v6e), ~2 MiB on v7x (64 MiB).
        block_budget = (8 << 20) if vmem_cap >= (96 << 20) else (2 << 20)
    else:
        block_budget = max(int(max_block_bytes), 8 * 128 * itemsize)

    # Lane-axis (D) tiling when even an 8-row stripe would blow the budget.
    if D > 128 and 8 * D * itemsize > block_budget:
        td = max(128, (block_budget // (8 * itemsize)) // 128 * 128)
    else:
        td = D

    # Row tiling: as many 8-row groups as fit in the budget ...
    rows = max(8, (block_budget // max(1, td * itemsize)) // 8 * 8)
    B8 = _round_up(B, 8)
    # ... but keep >= 2 row tiles when the batch allows it so v7x's two
    # TensorCores both get work on the "parallel" grid axis.
    tb_cap = _round_up(_cdiv(B8, 2), 8) if B8 >= 16 else B8
    tb = max(8, min(rows, tb_cap, B8))

    n_i = _cdiv(B, tb)
    n_j = _cdiv(D, td)
    mask_rows = (B % tb) != 0
    mask_cols = (D % td) != 0

    # Right-size the scoped VMEM limit from the actual footprint:
    # double-buffered x tile + double-buffered center + partial-output buffers.
    x_tile_bytes = tb * td * itemsize
    needed = 2 * x_tile_bytes + 2 * td * 4 + 2 * 8 * td * 4
    vmem_limit = min(needed + (4 << 20), max(vmem_cap // 2, needed + (1 << 20)))

    kernel = _make_mse_partial_kernel(B, D, tb, td, mask_rows, mask_cols)

    partials = pl.pallas_call(
        kernel,
        out_shape=jax.ShapeDtypeStruct((n_i, n_j, 8, td), jnp.float32),
        grid_spec=pltpu.PrefetchScalarGridSpec(
            num_scalar_prefetch=0,
            grid=(n_i, n_j),
            in_specs=[
                # Large lane-dense x tile.
                pl.BlockSpec((tb, td), lambda i, j: (i, j)),
                # Center slab: invariant over the row axis, resident in VMEM.
                pl.BlockSpec((1, td), lambda i, j: (0, j)),
            ],
            out_specs=pl.BlockSpec((1, 1, 8, td), lambda i, j: (i, j, 0, 0)),
        ),
        compiler_params=pltpu.CompilerParams(
            # Independent per-tile partials -> fully parallel grid
            # (megacore-shardable on v7x).
            dimension_semantics=("parallel", "parallel"),
            vmem_limit_bytes=int(vmem_limit),
        ),
    )(x, c)

    # Tiny final reduction + mean over the true (un-padded) element count.
    return jnp.sum(partials) / (B * D)


if __name__ == "__main__":
    key = jax.random.PRNGKey(0)
    k1, k2, k3, k4, k5 = jax.random.split(key, 5)

    def ref_loss(x, c):
        return jnp.mean((x.astype(jnp.float32) - c.astype(jnp.float32)[None, :]) ** 2)

    # 1) Primary check: small latent batch (8 latents of width 256), exact tiling.
    B, D = 8, 256
    x = jax.random.normal(k1, (B, D), dtype=jnp.float32)
    c = jax.random.normal(k2, (D,), dtype=jnp.float32)
    loss = jax.block_until_ready(latent_center_regularizer(x, c, force_pallas=True))
    assert jnp.allclose(loss, ref_loss(x, c), rtol=1e-6, atol=1e-6), (loss, ref_loss(x, c))

    # 2) Ragged batch (row masking path, 2 row tiles).
    B2, D2 = 12, 384
    x2 = jax.random.normal(k3, (B2, D2), dtype=jnp.float32)
    c2 = jax.random.normal(k2, (D2,), dtype=jnp.float32)
    loss2 = jax.block_until_ready(latent_center_regularizer(x2, c2, force_pallas=True))
    assert jnp.allclose(loss2, ref_loss(x2, c2), rtol=1e-6, atol=1e-6), (loss2, ref_loss(x2, c2))

    # 3) Forced tiny block budget: exercises D tiling + row AND column masking.
    B3, D3 = 20, 600
    x3 = jax.random.normal(k4, (B3, D3), dtype=jnp.float32)
    c3 = jax.random.normal(k5, (D3,), dtype=jnp.float32)
    loss3 = jax.block_until_ready(
        latent_center_regularizer(x3, c3, force_pallas=True, max_block_bytes=8 * 1024))
    assert jnp.allclose(loss3, ref_loss(x3, c3), rtol=1e-6, atol=1e-6), (loss3, ref_loss(x3, c3))

    # 4) Auto path (tiny input -> pure-JAX fallback) agrees too.
    loss4 = jax.block_until_ready(latent_center_regularizer(x, c))
    assert jnp.allclose(loss4, ref_loss(x, c), rtol=1e-6, atol=1e-6), (loss4, ref_loss(x, c))

    print("KERNEL_OK")
</pallas_src>

<mosaic_0001>
module attributes {stable_mosaic.version = 11 : i64} {
  func.func @kernel(%arg0: i32, %arg1: i32, %arg2: memref<8x256xf32, #tpu.memory_space<vmem>>, %arg3: memref<1x256xf32, #tpu.memory_space<vmem>>, %arg4: memref<1x1x8x256xf32, #tpu.memory_space<vmem>>) attributes {dimension_semantics = [#tpu.dimension_semantics<parallel>, #tpu.dimension_semantics<parallel>], iteration_bounds = array<i64: 1, 1>, scalar_prefetch = 0 : i64, scratch_operands = 0 : i64, tpu.core_type = #tpu.core_type<tc>, window_params = [{transform_indices = @transform_0, window_bounds = array<i64: 8, 256>}, {transform_indices = @transform_1, window_bounds = array<i64: 1, 256>}, {transform_indices = @transform_2, window_bounds = array<i64: 1, 1, 8, 256>}]} {
    %c0 = arith.constant 0 : index
    %c0_0 = arith.constant 0 : index
    %0 = vector.load %arg2[%c0, %c0_0] : memref<8x256xf32, #tpu.memory_space<vmem>>, vector<8x256xf32>
    %c0_1 = arith.constant 0 : index
    %c0_2 = arith.constant 0 : index
    %1 = vector.load %arg3[%c0_1, %c0_2] : memref<1x256xf32, #tpu.memory_space<vmem>>, vector<1x256xf32>
    %2 = vector.broadcast %1 : vector<1x256xf32> to vector<8x256xf32>
    %3 = arith.subf %0, %2 : vector<8x256xf32>
    %4 = arith.mulf %3, %3 : vector<8x256xf32>
    %5 = vector.shape_cast %4 : vector<8x256xf32> to vector<1x8x256xf32>
    %cst = arith.constant dense<0.000000e+00> : vector<8x256xf32>
    %6 = vector.multi_reduction <add>, %5, %cst [0] : vector<1x8x256xf32> to vector<8x256xf32>
    %7 = vector.shape_cast %6 : vector<8x256xf32> to vector<1x1x8x256xf32>
    %c0_3 = arith.constant 0 : index
    %c0_4 = arith.constant 0 : index
    %c0_5 = arith.constant 0 : index
    %c0_6 = arith.constant 0 : index
    %8 = vector.load %arg4[%c0_3, %c0_4, %c0_5, %c0_6] : memref<1x1x8x256xf32, #tpu.memory_space<vmem>>, vector<1x1x8x256xf32>
    tpu.vector_store %arg4[%c0_3, %c0_4, %c0_5, %c0_6], %7 {strides = array<i32>} : memref<1x1x8x256xf32, #tpu.memory_space<vmem>>, vector<1x1x8x256xf32>,
    return
  }
  func.func @transform_0(%arg0: i32, %arg1: i32) -> (i32, i32) {
    %c0_i32 = arith.constant 0 : i32
    return %arg0, %arg1 : i32, i32
  }
  func.func @transform_1(%arg0: i32, %arg1: i32) -> (i32, i32) {
    %c0_i32 = arith.constant 0 : i32
    %c0_i32_0 = arith.constant 0 : i32
    return %c0_i32, %arg1 : i32, i32
  }
  func.func @transform_2(%arg0: i32, %arg1: i32) -> (i32, i32, i32, i32) {
    %c0_i32 = arith.constant 0 : i32
    %c0_i32_0 = arith.constant 0 : i32
    %c0_i32_1 = arith.constant 0 : i32
    return %arg0, %arg1, %c0_i32, %c0_i32_0 : i32, i32, i32, i32
  }
}

</mosaic_0001>

<llo_original>
// kernel: tpu_custom_call.1
$region0: #{tpu_custom_call.1}
  #allocation0 [shape = 'u32[]', space=smem, size = 0x4, offset = 0x4, fixed_abs, tag = 'smem constant byte address 0x4 - core index']
  #allocation1 [shape = 'u32[72,128]{1,0:T(1,128)}', space=vmem, size = 0x9000, scoped, tag = 'internal scratch']
  %s0 = inlined_call_operand.hbm [shape: f32[8,256], index: 0, kind: input, shape index: {}]
  %s1 = inlined_call_operand.hbm [shape: f32[1,256], index: 1, kind: input, shape index: {}]
  %s2 = inlined_call_operand.hbm [shape: f32[1,1,8,256], index: 2, kind: output, shape index: {}]
  %s3 = sld [smem:[#allocation0]]
  $region26: #{tpu_custom_call.1} parent=0
    _
  %s5 = ssub.s32 1, %s3
  %s6 = scalar_select 0, %s5, %s3
  $region1: #{tpu_custom_call.1} parent=0
    #allocation2 [shape = 'u8[8192]{0}', space=vmem, size = 0x2000, scoped, tag = 'input window, operand 0, single buffered']
    #allocation3 [shape = 's32[1]{0}', space=sflag, size = 0x4, scoped, tag = 'scoped memory for tpu_custom_call.1']
    #allocation4 [shape = 's32[1]{0}', space=sflag, size = 0x4, scoped, tag = 'scoped memory for tpu_custom_call.1']
    #allocation5 [shape = 'u8[1024]{0}', space=vmem, size = 0x400, scoped, tag = 'input window, operand 1, single buffered']
    #allocation6 [shape = 's32[1]{0}', space=sflag, size = 0x4, scoped, tag = 'scoped memory for tpu_custom_call.1']
    #allocation7 [shape = 'u8[8192]{0}', space=vmem, size = 0x2000, scoped, tag = 'output window, operand 0, single buffered']
    %7 = vsyncpa [#allocation3], 0
    %8 = vsyncpa [#allocation6], 0
    %9 = vsyncpa [#allocation4], 0
    // Predicated region
    $region2: #{tpu_custom_call.1} parent=1 // pred_check
      _
    $region3: #{tpu_custom_call.1} parent=1 // pred_check_branch
      %11 = sbr.rel (0) target = $region5
    $region4: #{tpu_custom_call.1} parent=1 // pred_region
      %13 = vsyncadd [#allocation3], 0
      %s15 = sshll.u32 %s0, 4
      %s16 = int_to_ptr.hbm [resolvable:$true] %s15
      %s17 = sshll.u32 [#allocation2], 4
      %s18 = int_to_ptr.vmem [resolvable:$true] %s17
      %20 = dma.hbm_to_vmem [thread:$0]  %s16, 256, %s18, [#allocation3]
    $region5: #{tpu_custom_call.1} parent=1 // pred_fallthru
      _
    // Predicated region
    $region6: #{tpu_custom_call.1} parent=1 // pred_check
      _
    $region7: #{tpu_custom_call.1} parent=1 // pred_check_branch
      %22 = sbr.rel (0) target = $region9
    $region8: #{tpu_custom_call.1} parent=1 // pred_region
      %24 = vsyncadd [#allocation6], 0
      %s26 = sshll.u32 %s1, 4
      %s27 = int_to_ptr.hbm [resolvable:$true] %s26
      %s28 = sshll.u32 [#allocation5], 4
      %s29 = int_to_ptr.vmem [resolvable:$true] %s28
      %31 = dma.hbm_to_vmem [thread:$0]  %s27, 32, %s29, [#allocation6]
    $region9: #{tpu_custom_call.1} parent=1 // pred_fallthru
      _
    // Predicated region
    $region10: #{tpu_custom_call.1} parent=1 // pred_check
      _
    $region11: #{tpu_custom_call.1} parent=1 // pred_check_branch
      %33 = sbr.rel (0) target = $region13
    $region12: #{tpu_custom_call.1} parent=1 // pred_region
      %35 = dma.done [#allocation3], 256
    $region13: #{tpu_custom_call.1} parent=1 // pred_fallthru
      _
    // Predicated region
    $region14: #{tpu_custom_call.1} parent=1 // pred_check
      _
    $region15: #{tpu_custom_call.1} parent=1 // pred_check_branch
      %37 = sbr.rel (0) target = $region17
    $region16: #{tpu_custom_call.1} parent=1 // pred_region
      %39 = dma.done [#allocation6], 32
    $region17: #{tpu_custom_call.1} parent=1 // pred_fallthru
      _
    %v40 = vld [vmem:[#allocation2] sm:$0xff]
    %v41 = vld [vmem:[#allocation2 + $0x8] sm:$0xff]
    %v42 = vld [vmem:[#allocation5] sm:$0x3]
    %v44 = vperm.slane %v42, 0
    %v45 = vperm.slane %v42, 1
    %v48 = vsub.f32 %v40, %v44
    %v49 = vsub.f32 %v41, %v45
    %v50 = vmul.f32 %v48, %v48
    %v51 = vmul.f32 %v49, %v49
    %v52 = vadd.f32 %v50, 0.0
    %v53 = vadd.f32 %v51, 0.0
    %54 = vst [vmem:[#allocation7] sm:$0xff] %v52
    %55 = vst [vmem:[#allocation7 + $0x8] sm:$0xff] %v53
    // Predicated region
    $region18: #{tpu_custom_call.1} parent=1 // pred_check
      _
    $region19: #{tpu_custom_call.1} parent=1 // pred_check_branch
      %57 = sbr.rel (0) target = $region21
    $region20: #{tpu_custom_call.1} parent=1 // pred_region
      %59 = vsyncadd [#allocation4], 0
      %s61 = sshll.u32 [#allocation7], 4
      %s62 = int_to_ptr.vmem [resolvable:$true] %s61
      %s63 = sshll.u32 %s2, 4
      %s64 = int_to_ptr.hbm [resolvable:$true] %s63
      %66 = dma.vmem_to_hbm [thread:$0]  %s62, 256, %s64, [#allocation4]
    $region21: #{tpu_custom_call.1} parent=1 // pred_fallthru
      _
    // Predicated region
    $region22: #{tpu_custom_call.1} parent=1 // pred_check
      _
    $region23: #{tpu_custom_call.1} parent=1 // pred_check_branch
      %68 = sbr.rel (0) target = $region25
    $region24: #{tpu_custom_call.1} parent=1 // pred_region
      %70 = dma.done [#allocation4], 256
    $region25: #{tpu_custom_call.1} parent=1 // pred_fallthru
      _
    %71 = vsyncpa [#allocation3], 1
    %72 = vsyncpa [#allocation6], 1
    %73 = vsyncpa [#allocation4], 1

</llo_original>
